<compile_context>
chip_gen: v5e
topology: v5e:2x2
jax: 0.10.0
libtpu: 0.0.40
codegen_flags: <defaults>
</compile_context>

<pallas_src>
import jax
import jax.numpy as jnp
from jax.experimental import pallas as pl
from jax.experimental.pallas import tpu as pltpu

EPS = 1e-5


# ----------------------------- Pallas kernel -------------------------------

def _layer_norm_kernel(x_ref, g_ref, b_ref, o_ref):
    # x_ref: (1, C, P)   g_ref/b_ref: (C, 1)   o_ref: (1, C, P)
    x = x_ref[0]                                            # (C, P) f32
    c, p = x.shape
    n = c * p

    # mean over the whole per-sample slab; keep everything >= 2D for Mosaic.
    mean = jnp.sum(jnp.sum(x, axis=1, keepdims=True),
                   axis=0, keepdims=True) / n               # (1, 1)
    d = x - mean
    # unbiased variance (matches torch.Tensor.std default, ddof=1)
    var = jnp.sum(jnp.sum(d * d, axis=1, keepdims=True),
                  axis=0, keepdims=True) / (n - 1)          # (1, 1)
    inv = 1.0 / (jnp.sqrt(var) + EPS)                       # eps added to std

    y = d * inv                                             # (C, P)
    # per-channel affine, broadcast along lane axis P
    o_ref[0] = y * g_ref[...] + b_ref[...]


# ------------------------------- JAX wrapper --------------------------------

def layer_norm(x, gamma, beta, eps=EPS):
    """x: (N, C, H, W) f32; gamma/beta: (C,). Returns (N, C, H, W)."""
    del eps  # fixed EPS baked into the kernel (module default 1e-5)
    N, C, H, W = x.shape
    P = H * W
    x3 = x.reshape(N, C, P)                # layout-preserving, lane-dense (P last)
    g2 = gamma.reshape(C, 1).astype(jnp.float32)
    b2 = beta.reshape(C, 1).astype(jnp.float32)

    out = pl.pallas_call(
        _layer_norm_kernel,
        out_shape=jax.ShapeDtypeStruct((N, C, P), jnp.float32),
        grid=(N,),
        in_specs=[
            pl.BlockSpec((1, C, P), lambda n: (n, 0, 0)),
            pl.BlockSpec((C, 1), lambda n: (0, 0)),
            pl.BlockSpec((C, 1), lambda n: (0, 0)),
        ],
        out_specs=pl.BlockSpec((1, C, P), lambda n: (n, 0, 0)),
        compiler_params=pltpu.CompilerParams(
            dimension_semantics=("parallel",)),   # v7x: one sample per TensorCore
    )(x3, g2, b2)

    return out.reshape(N, C, H, W)


# --------------------------- pure-JAX reference ------------------------------

def layer_norm_ref(x, gamma, beta, eps=EPS):
    N = x.shape[0]
    xf = x.reshape(N, -1)
    mean = xf.mean(axis=1)
    std = xf.std(axis=1, ddof=1)                    # unbiased, like torch .std()
    shape = (N,) + (1,) * (x.ndim - 1)
    y = (x - mean.reshape(shape)) / (std.reshape(shape) + eps)
    gshape = (1, -1) + (1,) * (x.ndim - 2)
    return y * gamma.reshape(gshape) + beta.reshape(gshape)


# ----------------------------------- main ------------------------------------

if __name__ == "__main__":
    key = jax.random.PRNGKey(0)
    kx, kg = jax.random.split(key)

    N, C, H, W = 2, 4, 16, 16                       # num_features = C = 4
    x = jax.random.normal(kx, (N, C, H, W), jnp.float32)
    gamma = jax.random.uniform(kg, (C,), jnp.float32)   # matches .uniform_() init
    beta = jnp.zeros((C,), jnp.float32)                 # matches torch.zeros init

    out = jax.block_until_ready(layer_norm(x, gamma, beta))
    assert out.shape == (N, C, H, W), out.shape

    ref = jax.block_until_ready(layer_norm_ref(x, gamma, beta))
    assert jnp.allclose(out, ref, rtol=1e-4, atol=1e-4), (
        float(jnp.max(jnp.abs(out - ref))))

    print("KERNEL_OK")
</pallas_src>

<mosaic_0001>
module attributes {stable_mosaic.version = 11 : i64} {
  func.func @_layer_norm_kernel(%arg0: i32, %arg1: memref<1x4x256xf32, #tpu.memory_space<vmem>>, %arg2: memref<4x1xf32, #tpu.memory_space<vmem>>, %arg3: memref<4x1xf32, #tpu.memory_space<vmem>>, %arg4: memref<1x4x256xf32, #tpu.memory_space<vmem>>) attributes {dimension_semantics = [#tpu.dimension_semantics<parallel>], iteration_bounds = array<i64: 2>, scalar_prefetch = 0 : i64, scratch_operands = 0 : i64, tpu.core_type = #tpu.core_type<tc>, window_params = [{transform_indices = @transform_0, window_bounds = array<i64: 1, 4, 256>}, {pipeline_mode = #tpu.pipeline_mode<synchronous>, transform_indices = @transform_1, window_bounds = array<i64: 4, 1>}, {pipeline_mode = #tpu.pipeline_mode<synchronous>, transform_indices = @transform_2, window_bounds = array<i64: 4, 1>}, {transform_indices = @transform_3, window_bounds = array<i64: 1, 4, 256>}]} {
    %c0 = arith.constant 0 : index
    %c0_0 = arith.constant 0 : index
    %c0_1 = arith.constant 0 : index
    %0 = vector.load %arg1[%c0, %c0_0, %c0_1] : memref<1x4x256xf32, #tpu.memory_space<vmem>>, vector<1x4x256xf32>
    %1 = vector.shape_cast %0 : vector<1x4x256xf32> to vector<4x256xf32>
    %cst = arith.constant dense<0.000000e+00> : vector<4xf32>
    %2 = vector.multi_reduction <add>, %1, %cst [1] : vector<4x256xf32> to vector<4xf32>
    %3 = vector.shape_cast %2 : vector<4xf32> to vector<4x1xf32>
    %cst_2 = arith.constant dense<0.000000e+00> : vector<1xf32>
    %4 = vector.multi_reduction <add>, %3, %cst_2 [0] : vector<4x1xf32> to vector<1xf32>
    %5 = vector.shape_cast %4 : vector<1xf32> to vector<1x1xf32>
    %cst_3 = arith.constant 1.024000e+03 : f32
    %6 = vector.broadcast %cst_3 : f32 to vector<1x1xf32>
    %7 = arith.divf %5, %6 : vector<1x1xf32>
    %8 = vector.broadcast %7 : vector<1x1xf32> to vector<4x256xf32>
    %9 = arith.subf %1, %8 : vector<4x256xf32>
    %10 = arith.mulf %9, %9 : vector<4x256xf32>
    %cst_4 = arith.constant dense<0.000000e+00> : vector<4xf32>
    %11 = vector.multi_reduction <add>, %10, %cst_4 [1] : vector<4x256xf32> to vector<4xf32>
    %12 = vector.shape_cast %11 : vector<4xf32> to vector<4x1xf32>
    %cst_5 = arith.constant dense<0.000000e+00> : vector<1xf32>
    %13 = vector.multi_reduction <add>, %12, %cst_5 [0] : vector<4x1xf32> to vector<1xf32>
    %14 = vector.shape_cast %13 : vector<1xf32> to vector<1x1xf32>
    %cst_6 = arith.constant 1.023000e+03 : f32
    %15 = vector.broadcast %cst_6 : f32 to vector<1x1xf32>
    %16 = arith.divf %14, %15 : vector<1x1xf32>
    %17 = math.sqrt %16 : vector<1x1xf32>
    %cst_7 = arith.constant 9.99999974E-6 : f32
    %18 = vector.broadcast %cst_7 : f32 to vector<1x1xf32>
    %19 = arith.addf %17, %18 : vector<1x1xf32>
    %cst_8 = arith.constant 1.000000e+00 : f32
    %20 = vector.broadcast %cst_8 : f32 to vector<1x1xf32>
    %21 = arith.divf %20, %19 : vector<1x1xf32>
    %22 = vector.broadcast %21 : vector<1x1xf32> to vector<4x256xf32>
    %23 = arith.mulf %9, %22 : vector<4x256xf32>
    %c0_9 = arith.constant 0 : index
    %c0_10 = arith.constant 0 : index
    %24 = vector.load %arg2[%c0_9, %c0_10] : memref<4x1xf32, #tpu.memory_space<vmem>>, vector<4x1xf32>
    %25 = vector.broadcast %24 : vector<4x1xf32> to vector<4x256xf32>
    %26 = arith.mulf %23, %25 : vector<4x256xf32>
    %c0_11 = arith.constant 0 : index
    %c0_12 = arith.constant 0 : index
    %27 = vector.load %arg3[%c0_11, %c0_12] : memref<4x1xf32, #tpu.memory_space<vmem>>, vector<4x1xf32>
    %28 = vector.broadcast %27 : vector<4x1xf32> to vector<4x256xf32>
    %29 = arith.addf %26, %28 : vector<4x256xf32>
    %c0_13 = arith.constant 0 : index
    %c0_14 = arith.constant 0 : index
    %c0_15 = arith.constant 0 : index
    %30 = vector.load %arg4[%c0_13, %c0_14, %c0_15] : memref<1x4x256xf32, #tpu.memory_space<vmem>>, vector<1x4x256xf32>
    %31 = vector.shape_cast %30 : vector<1x4x256xf32> to vector<4x256xf32>
    %32 = vector.shape_cast %29 : vector<4x256xf32> to vector<1x4x256xf32>
    tpu.vector_store %arg4[%c0_13, %c0_14, %c0_15], %32 {strides = array<i32>} : memref<1x4x256xf32, #tpu.memory_space<vmem>>, vector<1x4x256xf32>,
    return
  }
  func.func @transform_0(%arg0: i32) -> (i32, i32, i32) {
    %c0_i32 = arith.constant 0 : i32
    %c0_i32_0 = arith.constant 0 : i32
    %c0_i32_1 = arith.constant 0 : i32
    return %arg0, %c0_i32, %c0_i32_0 : i32, i32, i32
  }
  func.func @transform_1(%arg0: i32) -> (i32, i32) {
    %c0_i32 = arith.constant 0 : i32
    %c0_i32_0 = arith.constant 0 : i32
    %c0_i32_1 = arith.constant 0 : i32
    return %c0_i32, %c0_i32_0 : i32, i32
  }
  func.func @transform_2(%arg0: i32) -> (i32, i32) {
    %c0_i32 = arith.constant 0 : i32
    %c0_i32_0 = arith.constant 0 : i32
    %c0_i32_1 = arith.constant 0 : i32
    return %c0_i32, %c0_i32_0 : i32, i32
  }
  func.func @transform_3(%arg0: i32) -> (i32, i32, i32) {
    %c0_i32 = arith.constant 0 : i32
    %c0_i32_0 = arith.constant 0 : i32
    %c0_i32_1 = arith.constant 0 : i32
    return %arg0, %c0_i32, %c0_i32_0 : i32, i32, i32
  }
}

</mosaic_0001>

<llo_original>
// kernel: tpu_custom_call.1
$region0: #{tpu_custom_call.1}
  #allocation0 [shape = 'u32[]', space=smem, size = 0x4, offset = 0x4, fixed_abs, tag = 'smem constant byte address 0x4 - core index']
  #allocation1 [shape = 'u32[72,128]{1,0:T(1,128)}', space=vmem, size = 0x9000, scoped, tag = 'internal scratch']
  %s0 = inlined_call_operand.hbm [shape: f32[2,4,256], index: 0, kind: input, shape index: {}]
  %s1 = inlined_call_operand.vmem [shape: f32[4,1], index: 1, kind: input, shape index: {}]
  %s2 = inlined_call_operand.vmem [shape: f32[4,1], index: 2, kind: input, shape index: {}]
  %s3 = inlined_call_operand.hbm [shape: f32[2,4,256], index: 3, kind: output, shape index: {}]
  %s4 = sld [smem:[#allocation0]]
  $region49: #{tpu_custom_call.1} parent=0
    _
  %s6 = ssub.s32 1, %s4
  %s7 = scalar_select 0, %s6, %s4
  $region1: #{tpu_custom_call.1} parent=0
    #allocation2 [shape = 'u8[8192]{0}', space=vmem, size = 0x2000, scoped, tag = 'input window, operand 0']
    #allocation3 [shape = 's32[2]{0}', space=sflag, size = 0x8, scoped, tag = 'scoped memory for tpu_custom_call.1']
    #allocation4 [shape = 's32[2]{0}', space=sflag, size = 0x8, scoped, tag = 'scoped memory for tpu_custom_call.1']
    #allocation5 [shape = 'u8[8192]{0}', space=vmem, size = 0x2000, scoped, tag = 'output window, operand 0']
    %8 = vsyncpa [#allocation3], 0
    %s9 = scalar_lea.sflag [#allocation3], 1
    %10 = vsyncpa %s9, 0
    %11 = vsyncpa [#allocation4], 0
    %s12 = scalar_lea.sflag [#allocation4], 1
    %13 = vsyncpa %s12, 0
    loop: start=0, step=1, limit=4
    $region2: #{tpu_custom_call.1} parent=1 // loop_pre_header
      _
    $region3: #{tpu_custom_call.1} parent=1 // loop_header
      %s15 = sphi 0, %s19
      %p16 = scmp.ge.s32.totalorder %s15, 4
      %s25 = sphi 0, %s27
      %s28 = sphi 0, %s25
      %s29 = sphi 0, %s28
      %s45 = sphi 0, %s29
      %s49 = sphi 0, %s49
      %s51 = sphi 0, %s49
      %s52 = sphi 0, %s51
      %s66 = sphi 0, %s52
      %s70 = sphi 0, %s70
      %s72 = sphi 0, %s70
      %s73 = sphi 0, %s72
      %s87 = sphi 0, %s73
      %s93 = sphi 0, %s95
      %s96 = sphi 0, %s93
      %s97 = sphi 0, %s96
      %s113 = sphi 0, %s97
    $region4: #{tpu_custom_call.1} parent=1 // loop_header_branch
      %18 = sbr.rel (%p16) target = $region8
    $region5: #{tpu_custom_call.1} parent=1 // loop_body
      %s20 = ssub.s32 %s15, 1
      %s21 = ssub.s32 %s15, 2
      %s22 = sadd.s32 %s15, 1
      %s23 = ssub.s32 %s15, %s22
      %p24 = scmp.eq.s32.totalorder %s23, 0
      %s26 = sadd.s32 %s25, 1
      %s27 = scalar_select %p24, %s25, %s26
      %p30 = pneg %p24
      %p31 = scmp.eq.s32.totalorder %s15, 1
      %p32 = por %p30, %p31
      %p33 = scmp.ne.s32.totalorder %s25, %s28
      %p34 = scmp.eq.s32.totalorder %s15, 0
      %p35 = por %p33, %p34
      %p36 = scmp.ne.s32.totalorder %s25, %s28
      %p37 = scmp.eq.s32.totalorder %s20, 1
      %p38 = por %p36, %p37
      %p39 = scmp.ne.s32.totalorder %s28, %s29
      %p40 = scmp.eq.s32.totalorder %s20, 0
      %p41 = por %p39, %p40
      %p42 = scmp.ne.s32.totalorder %s28, %s29
      %p43 = scmp.eq.s32.totalorder %s21, 1
      %p44 = por %p42, %p43
      %p46 = scmp.ne.s32.totalorder %s29, %s45
      %p47 = scmp.eq.s32.totalorder %s21, 0
      %p48 = por %p46, %p47
      %s50 = sadd.s32 %s49, 1
      %p53 = scmp.eq.s32.totalorder %s15, 1
      %p54 = scmp.ne.s32.totalorder %s49, %s51
      %p55 = scmp.eq.s32.totalorder %s15, 0
      %p56 = por %p54, %p55
      %p57 = scmp.ne.s32.totalorder %s49, %s51
      %p58 = scmp.eq.s32.totalorder %s20, 1
      %p59 = por %p57, %p58
      %p60 = scmp.ne.s32.totalorder %s51, %s52
      %p61 = scmp.eq.s32.totalorder %s20, 0
      %p62 = por %p60, %p61
      %p63 = scmp.ne.s32.totalorder %s51, %s52
      %p64 = scmp.eq.s32.totalorder %s21, 1
      %p65 = por %p63, %p64
      %p67 = scmp.ne.s32.totalorder %s52, %s66
      %p68 = scmp.eq.s32.totalorder %s21, 0
      %p69 = por %p67, %p68
      %s71 = sadd.s32 %s70, 1
      %p74 = scmp.eq.s32.totalorder %s15, 1
      %p75 = scmp.ne.s32.totalorder %s70, %s72
      %p76 = scmp.eq.s32.totalorder %s15, 0
      %p77 = por %p75, %p76
      %p78 = scmp.ne.s32.totalorder %s70, %s72
      %p79 = scmp.eq.s32.totalorder %s20, 1
      %p80 = por %p78, %p79
      %p81 = scmp.ne.s32.totalorder %s72, %s73
      %p82 = scmp.eq.s32.totalorder %s20, 0
      %p83 = por %p81, %p82
      %p84 = scmp.ne.s32.totalorder %s72, %s73
      %p85 = scmp.eq.s32.totalorder %s21, 1
      %p86 = por %p84, %p85
      %p88 = scmp.ne.s32.totalorder %s73, %s87
      %p89 = scmp.eq.s32.totalorder %s21, 0
      %p90 = por %p88, %p89
      %s91 = ssub.s32 %s15, %s22
      %p92 = scmp.eq.s32.totalorder %s91, 0
      %s94 = sadd.s32 %s93, 1
      %s95 = scalar_select %p92, %s93, %s94
      %p98 = pneg %p92
      %p99 = scmp.eq.s32.totalorder %s15, 1
      %p100 = por %p98, %p99
      %p101 = scmp.ne.s32.totalorder %s93, %s96
      %p102 = scmp.eq.s32.totalorder %s15, 0
      %p103 = por %p101, %p102
      %p104 = scmp.ne.s32.totalorder %s93, %s96
      %p105 = scmp.eq.s32.totalorder %s20, 1
      %p106 = por %p104, %p105
      %p107 = scmp.ne.s32.totalorder %s96, %s97
      %p108 = scmp.eq.s32.totalorder %s20, 0
      %p109 = por %p107, %p108
      %p110 = scmp.ne.s32.totalorder %s96, %s97
      %p111 = scmp.eq.s32.totalorder %s21, 1
      %p112 = por %p110, %p111
      %p114 = scmp.ne.s32.totalorder %s97, %s113
      %p115 = scmp.eq.s32.totalorder %s21, 0
      %p116 = por %p114, %p115
      %p117 = scmp.le.s32.totalorder 1, %s15
      %p118 = scmp.lt.s32.totalorder %s15, 3
      %p119 = pnand %p117, %p118
      %p120 = pneg %p119
      // Predicated region
      $region9: #{tpu_custom_call.1} parent=5 // pred_check
        _
      $region10: #{tpu_custom_call.1} parent=5 // pred_check_branch
        %122 = sbr.rel (%p119) target = $region12
      $region11: #{tpu_custom_call.1} parent=5 // pred_region
        %s123 = ssub.s32 %s15, 1
        // Predicated region
        $region13: #{tpu_custom_call.1} parent=11 // pred_check
          %p124 = pneg %p62
        $region14: #{tpu_custom_call.1} parent=11 // pred_check_branch
          %126 = sbr.rel (%p124) target = $region16
        $region15: #{tpu_custom_call.1} parent=11 // pred_region
          _
        $region16: #{tpu_custom_call.1} parent=11 // pred_fallthru
          _
        // Predicated region
        $region17: #{tpu_custom_call.1} parent=11 // pred_check
          %p127 = pneg %p83
        $region18: #{tpu_custom_call.1} parent=11 // pred_check_branch
          %129 = sbr.rel (%p127) target = $region20
        $region19: #{tpu_custom_call.1} parent=11 // pred_region
          _
        $region20: #{tpu_custom_call.1} parent=11 // pred_fallthru
          _
      $region12: #{tpu_custom_call.1} parent=5 // pred_fallthru
        _
      %p130 = scmp.lt.s32.totalorder %s15, 2
      // Predicated region
      $region21: #{tpu_custom_call.1} parent=5 // pred_check
        %p131 = pneg %p130
      $region22: #{tpu_custom_call.1} parent=5 // pred_check_branch
        %133 = sbr.rel (%p131) target = $region24
      $region23: #{tpu_custom_call.1} parent=5 // pred_region
        // Predicated region
        $region25: #{tpu_custom_call.1} parent=23 // pred_check
          %p134 = pneg %p35
        $region26: #{tpu_custom_call.1} parent=23 // pred_check_branch
          %136 = sbr.rel (%p134) target = $region28
        $region27: #{tpu_custom_call.1} parent=23 // pred_region
          %s137 = sand.u32 %s25, 1
          %s138 = scalar_lea.sflag [#allocation3], %s137
          %s139 = sand.u32 %s25, 1
          %s140 = smul.addr %s139, 8
          %s141 = scalar_lea.vmem [#allocation2], %s140
          %143 = vsyncadd %s138, 0
          %s144 = smul.addr %s15, 2
          %s145 = smul.addr %s144, 4
          %s146 = scalar_lea.hbm %s0, %s145
          %s148 = sshll.u32 %s146, 4
          %s149 = int_to_ptr.hbm [resolvable:$true] %s148
          %s150 = sshll.u32 %s141, 4
          %s151 = int_to_ptr.vmem [resolvable:$true] %s150
          %153 = dma.hbm_to_vmem [thread:$0]  %s149, 128, %s151, %s138
        $region28: #{tpu_custom_call.1} parent=23 // pred_fallthru
          _
      $region24: #{tpu_custom_call.1} parent=5 // pred_fallthru
        _
      %p154 = scmp.le.s32.totalorder 1, %s15
      %p155 = scmp.lt.s32.totalorder %s15, 3
      %p156 = pnand %p154, %p155
      %p157 = pneg %p156
      // Predicated region
      $region29: #{tpu_custom_call.1} parent=5 // pred_check
        _
      $region30: #{tpu_custom_call.1} parent=5 // pred_check_branch
        %159 = sbr.rel (%p156) target = $region32
      $region31: #{tpu_custom_call.1} parent=5 // pred_region
        %s160 = ssub.s32 %s15, 1
        %s161 = sand.u32 %s28, 1
        %s162 = scalar_lea.sflag [#allocation3], %s161
        %s163 = sand.u32 %s28, 1
        %s164 = smul.addr %s163, 8
        %s165 = scalar_lea.vmem [#allocation2], %s164
        // Predicated region
        $region33: #{tpu_custom_call.1} parent=31 // pred_check
          %p166 = pneg %p41
        $region34: #{tpu_custom_call.1} parent=31 // pred_check_branch
          %168 = sbr.rel (%p166) target = $region36
        $region35: #{tpu_custom_call.1} parent=31 // pred_region
          %170 = dma.done %s162, 128
        $region36: #{tpu_custom_call.1} parent=31 // pred_fallthru
          _
        %s171 = sand.u32 %s28, 1
        %s172 = scalar_lea.sflag [#allocation3], %s171
        %s173 = sand.u32 %s28, 1
        %s174 = smul.addr %s173, 8
        %s175 = scalar_lea.vmem [#allocation2], %s174
        %p176 = pneg %p41
        %p177 = pneg %p38
        %p178 = pneg %p62
        %p179 = pneg %p59
        %p180 = pneg %p83
        %p181 = pneg %p80
        %p182 = pneg %p109
        %p183 = pneg %p106
        %s184 = sand.u32 %s96, 1
        %s185 = scalar_lea.sflag [#allocation4], %s184
        %s186 = sand.u32 %s96, 1
        %s187 = smul.addr %s186, 8
        %s188 = scalar_lea.vmem [#allocation5], %s187
        %v189 = vld [vmem:[%s165] sm:$0xff]
        %191 = vst [vmem:[#allocation1] ss:$2 sm:$0xff] %v189
        %v192 = vld.sshfl [vmem:[#allocation1] sm:$0xff pattern:$0x75316420]
        %v193 = vld.sshfl [vmem:[#allocation1 + $0x8] sm:$0xff pattern:$0x75316420]
        %vm196 = vcmask 1043456
        %v197 = vsel %vm196, %v192, 0.0
        %v198 = vsel %vm196, %v193, 0.0
        %v199 = vadd.f32 %v197, %v198
        %200 = vadd.xlane.f32.xlu0 %v199
        %v201 = vpop.xlane.xlu0 %200
        %v202 = vsel %vm196, %v201, 0.0
        %v203 = vrot.slane %v202, 4
        %v204 = vadd.f32 %v202, %v203
        %v205 = vrot.slane %v204, 2
        %v206 = vadd.f32 %v204, %v205
        %v207 = vrot.slane %v206, 1
        %v208 = vadd.f32 %v206, %v207
        %v209 = vrcp.pop 1024.0
        %v210 = vmul.f32 1024.0, %v209
        %v211 = vsub.f32 1.0, %v210
        %v212 = vmul.f32 %v209, %v211
        %v213 = vadd.f32 %v209, %v212
        %vm214 = vweird.f32 %v209
        %v215 = vsel %vm214, %v209, %v213
        %v216 = vmul.f32 %v208, %v215
        %v217 = vsub.f32 %v189, %v216
        %v218 = vmul.f32 %v217, %v217
        %220 = vst [vmem:[#allocation1] ss:$2 sm:$0xff] %v218
        %v221 = vld.sshfl [vmem:[#allocation1] sm:$0xff pattern:$0x75316420]
        %v222 = vld.sshfl [vmem:[#allocation1 + $0x8] sm:$0xff pattern:$0x75316420]
        %v225 = vsel %vm196, %v221, 0.0
        %v226 = vsel %vm196, %v222, 0.0
        %v227 = vadd.f32 %v225, %v226
        %228 = vadd.xlane.f32.xlu0 %v227
        %v229 = vpop.xlane.xlu0 %228
        %v230 = vsel %vm196, %v229, 0.0
        %v231 = vrot.slane %v230, 4
        %v232 = vadd.f32 %v230, %v231
        %v233 = vrot.slane %v232, 2
        %v234 = vadd.f32 %v232, %v233
        %v235 = vrot.slane %v234, 1
        %v236 = vadd.f32 %v234, %v235
        %v237 = vrcp.pop 1023.0
        %v238 = vmul.f32 1023.0, %v237
        %v239 = vsub.f32 1.0, %v238
        %v240 = vmul.f32 %v237, %v239
        %v241 = vadd.f32 %v237, %v240
        %vm242 = vweird.f32 %v237
        %v243 = vsel %vm242, %v237, %v241
        %v244 = vmul.f32 %v236, %v243
        %v245 = vrsqrt.pop %v244
        %v246 = vmul.f32 %v245, %v244
        %v247 = vmul.f32 %v246, %v245
        %v248 = vmul.f32 0.5, %v247
        %v249 = vsub.f32 1.5, %v248
        %v250 = vmul.f32 %v245, %v249
        %v251 = vmul.f32 %v244, %v250
        %vm252 = vcmp.eq.f32.partialorder %v244, inf
        %v253 = vsel %vm252, %v244, %v251
        %vm254 = vcmp.eq.f32.partialorder %v244, 0.0
        %v255 = vand.u32 %v244, 2147483648
        %v256 = vsel %vm254, %v255, %v253
        %v257 = vadd.f32 %v256, 1e-05
        %v258 = vrcp.pop %v257
        %v259 = vmul.f32 %v257, %v258
        %v260 = vsub.f32 1.0, %v259
        %v261 = vmul.f32 %v258, %v260
        %v262 = vadd.f32 %v258, %v261
        %vm263 = vweird.f32 %v257
        %vm264 = vweird.f32 %v258
        %vm265 = vmor %vm263, %vm264
        %v266 = vsel %vm265, %v258, %v262
        %v267 = vand.u32 2147483647, %v257
        %vm268 = vcmp.eq.f32.partialorder %v267, 8.507059e+37
        %v269 = vand.u32 %v257, 2147483648
        %v270 = vor.u32 1.1754944e-38, %v269
        %v271 = vsel %vm268, %v270, %v266
        %v272 = vmul.f32 1.0, %v271
        %v273 = vmul.f32 %v217, %v272
        %v274 = vld [vmem:[%s1] sm:$0xf]
        %276 = vset.pattern.permute.xlu0 0
        %277 = vperm.xlu0 %276, %v274
        %v278 = vpop.permute.xlu0 %277
        %v280 = vunpack.c.l.s4 839922192
        %v281 = vunpack.c.0.s8 %v280
        %v282 = vperm.slane %v278, %v281
        %v284 = vmul.f32 %v273, %v282
        %v285 = vld [vmem:[%s2] sm:$0xf]
        %287 = vset.pattern.permute.xlu0 0
        %288 = vperm.xlu0 %287, %v285
        %v289 = vpop.permute.xlu0 %288
        %v291 = vunpack.c.l.s4 839922192
        %v292 = vunpack.c.0.s8 %v291
        %v293 = vperm.slane %v289, %v292
        %v295 = vadd.f32 %v284, %v293
        %296 = vst [vmem:[%s188] sm:$0xff] %v295
        %s297 = sand.u32 %s96, 1
        %s298 = scalar_lea.sflag [#allocation4], %s297
        %s299 = sand.u32 %s96, 1
        %s300 = smul.addr %s299, 8
        %s301 = scalar_lea.vmem [#allocation5], %s300
        // Predicated region
        $region37: #{tpu_custom_call.1} parent=31 // pred_check
          %p302 = pneg %p106
        $region38: #{tpu_custom_call.1} parent=31 // pred_check_branch
          %304 = sbr.rel (%p302) target = $region40
        $region39: #{tpu_custom_call.1} parent=31 // pred_region
          %306 = vsyncadd %s298, 0
          %s307 = smul.addr %s20, 2
          %s308 = smul.addr %s307, 4
          %s309 = scalar_lea.hbm %s3, %s308
          %s311 = sshll.u32 %s301, 4
          %s312 = int_to_ptr.vmem [resolvable:$true] %s311
          %s313 = sshll.u32 %s309, 4
          %s314 = int_to_ptr.hbm [resolvable:$true] %s313
          %316 = dma.vmem_to_hbm [thread:$0]  %s312, 128, %s314, %s298
        $region40: #{tpu_custom_call.1} parent=31 // pred_fallthru
          _
      $region32: #{tpu_custom_call.1} parent=5 // pred_fallthru
        _
      %p317 = scmp.le.s32.totalorder 2, %s15
      // Predicated region
      $region41: #{tpu_custom_call.1} parent=5 // pred_check
        %p318 = pneg %p317
      $region42: #{tpu_custom_call.1} parent=5 // pred_check_branch
        %320 = sbr.rel (%p318) target = $region44
      $region43: #{tpu_custom_call.1} parent=5 // pred_region
        %s321 = ssub.s32 %s15, 2
        // Predicated region
        $region45: #{tpu_custom_call.1} parent=43 // pred_check
          %p322 = pneg %p112
        $region46: #{tpu_custom_call.1} parent=43 // pred_check_branch
          %324 = sbr.rel (%p322) target = $region48
        $region47: #{tpu_custom_call.1} parent=43 // pred_region
          %s325 = sand.u32 %s97, 1
          %s326 = scalar_lea.sflag [#allocation4], %s325
          %s327 = sand.u32 %s97, 1
          %s328 = smul.addr %s327, 8
          %s329 = scalar_lea.vmem [#allocation5], %s328
          %331 = dma.done %s326, 128
        $region48: #{tpu_custom_call.1} parent=43 // pred_fallthru
          _
      $region44: #{tpu_custom_call.1} parent=5 // pred_fallthru
        _
    $region6: #{tpu_custom_call.1} parent=1 // loop_footer
      %s19 = sadd.s32 1, %s15
    $region7: #{tpu_custom_call.1} parent=1 // loop_footer_branch
      %14 = sbr.rel target = $region3
    $region8: #{tpu_custom_call.1} parent=1 // loop_exit
      _
    %332 = vsyncpa [#allocation3], 1
    %s333 = scalar_lea.sflag [#allocation3], 1
    %334 = vsyncpa %s333, 1
    %335 = vsyncpa [#allocation4], 1
    %s336 = scalar_lea.sflag [#allocation4], 1
    %337 = vsyncpa %s336, 1

</llo_original>
